<compile_context>
chip_gen: v6e
topology: v6e:2x2x1
jax: 0.10.0
libtpu: 0.0.40
codegen_flags: <defaults>
</compile_context>

<pallas_src>
import jax
import jax.numpy as jnp
from jax import lax
from jax.experimental import pallas as pl
from jax.experimental.pallas import tpu as pltpu

_TARGET_TILE_BYTES = 4 * 1024 * 1024   # per-input, per-pipeline-buffer tile
_MAX_TD = 2048                         # lane-dim tile cap (multiple of 128)
_SMALL_FALLBACK_ELEMS = 1 << 20        # below this, plain-XLA path wins


def _round_up(x: int, m: int) -> int:
    return ((x + m - 1) // m) * m


def _round_down(x: int, m: int) -> int:
    return (x // m) * m


def _make_rmse_kernel(D: int, TD: int, num_d_tiles: int, use_fast_diff: bool):
    inv_d = 1.0 / float(D)
    tail_cols = D - (num_d_tiles - 1) * TD      # static; == TD when no masking
    needs_d_mask = tail_cols != TD
    last_d = num_d_tiles - 1                    # static

    def kernel(yhat_ref, y_ref, rmse_ref, sumsq_ref):
        d_idx = pl.program_id(1)

        @pl.when(d_idx == 0)
        def _init():
            sumsq_ref[...] = jnp.zeros_like(sumsq_ref)

        if use_fast_diff:
            # Single cast (bf16 VALU on v6e/v7x); <= 1 bf16 ulp numerics delta.
            diff = (yhat_ref[...] - y_ref[...]).astype(jnp.float32)
        else:
            diff = (yhat_ref[...].astype(jnp.float32)
                    - y_ref[...].astype(jnp.float32))
        sq = diff * diff

        def _finalize():
            mse = sumsq_ref[...] * inv_d + 1e-8      # eps + sqrt once per row
            rmse_ref[...] = jnp.sqrt(mse)

        if needs_d_mask:
            # Bulk tiles: unmasked accumulate (no iota/compare/select VALU cost).
            @pl.when(d_idx != last_d)
            def _accum_full():
                sumsq_ref[...] += jnp.sum(sq, axis=1, keepdims=True)

            # Last (partial) tile only: mask padded columns, then finalize.
            @pl.when(d_idx == last_d)
            def _accum_masked_and_finalize():
                col = lax.broadcasted_iota(jnp.int32, sq.shape, 1)
                sq_m = jnp.where(col < tail_cols, sq, 0.0)
                sumsq_ref[...] += jnp.sum(sq_m, axis=1, keepdims=True)
                _finalize()
        else:
            sumsq_ref[...] += jnp.sum(sq, axis=1, keepdims=True)

            @pl.when(d_idx == last_d)
            def _fin():
                _finalize()

    return kernel


def _reference(yhat, y):
    yh = yhat.astype(jnp.float32)
    yt = y.astype(jnp.float32)
    return jnp.mean(jnp.sqrt(jnp.mean((yh - yt) ** 2, axis=1) + 1e-8))


def rmse_loss(yhat: jax.Array, y: jax.Array, *,
              use_pallas: bool | None = None,
              fast_low_precision_diff: bool = False) -> jax.Array:
    assert yhat.shape == y.shape and yhat.ndim == 2
    B, D = yhat.shape
    dtype = jnp.dtype(yhat.dtype)
    dtype_bytes = dtype.itemsize

    # ---- tiny-shape fallback ----------------------------------------------
    if use_pallas is None:
        use_pallas = (B * D) >= _SMALL_FALLBACK_ELEMS
    if not use_pallas:
        return _reference(yhat, y)

    # ---- tile sizing -------------------------------------------------------
    # Feature (lane) axis: full D if it fits, else split evenly into
    # multiple-of-128 tiles (128-aligned D then never needs masking).
    if D <= _MAX_TD:
        TD = D                                      # equals full dim -> legal
    else:
        n_d = pl.cdiv(D, _MAX_TD)
        TD = _round_up(pl.cdiv(D, n_d), 128)
    num_d_tiles = pl.cdiv(D, TD)

    # Batch (sublane) axis: multiple of the dtype's sublane packing, ~4 MiB per
    # input tile, and clamped so the "parallel" B axis has >= 2 tiles whenever
    # B allows it (v7x megacore sharding).
    sub = {4: 8, 2: 16, 1: 32}.get(dtype_bytes, 8)
    if B <= sub:
        TB = B                                      # equals full dim -> legal
    else:
        rows_budget = max(sub, _TARGET_TILE_BYTES // max(1, TD * dtype_bytes))
        TB = max(sub, min(_round_down(rows_budget, sub),
                          _round_up(B, sub), 1024))
        TB = min(TB, _round_up(-(-B // 2), sub))    # >= 2 B tiles

    grid = (pl.cdiv(B, TB), num_d_tiles)            # reduction (D) innermost

    use_fast_diff = fast_low_precision_diff and dtype == jnp.bfloat16
    kernel = _make_rmse_kernel(D, TD, num_d_tiles, use_fast_diff)

    per_row_rmse = pl.pallas_call(
        kernel,
        out_shape=jax.ShapeDtypeStruct((B, 1), jnp.float32),
        grid_spec=pltpu.PrefetchScalarGridSpec(
            num_scalar_prefetch=0,
            grid=grid,
            in_specs=[
                pl.BlockSpec((TB, TD), lambda i, k: (i, k)),
                pl.BlockSpec((TB, TD), lambda i, k: (i, k)),
            ],
            out_specs=pl.BlockSpec((TB, 1), lambda i, k: (i, 0)),
            scratch_shapes=[pltpu.VMEM((TB, 1), jnp.float32)],
        ),
        compiler_params=pltpu.CompilerParams(
            dimension_semantics=("parallel", "arbitrary"),
            vmem_limit_bytes=32 * 1024 * 1024,
        ),
        cost_estimate=pl.CostEstimate(
            flops=3 * B * D,
            transcendentals=B,
            bytes_accessed=2 * B * D * dtype_bytes + B * 4,
        ),
    )(yhat, y)

    # TODO(synk): if a v7x bundle dump still shows VALU as the saturated slot,
    # accumulate into a (TB, 128) scratch (or MXU ones-matmul) and lane-reduce
    # only in the finalize branch.

    # Tiny final reduction (B elements) in plain JAX.
    return jnp.mean(per_row_rmse)


if __name__ == "__main__":
    key = jax.random.PRNGKey(0)
    k1, k2, k3, k4, k5, k6 = jax.random.split(key, 6)

    # Small shape from the module's forward (batch, features). Force the
    # Pallas path so the kernel itself is exercised (the auto path would take
    # the tiny-shape XLA fallback here).
    B, D = 8, 128
    yhat = jax.random.normal(k1, (B, D), dtype=jnp.float32)
    y = jax.random.normal(k2, (B, D), dtype=jnp.float32)
    loss = rmse_loss(yhat, y, use_pallas=True)
    jax.block_until_ready(loss)
    ref = _reference(yhat, y)
    assert jnp.allclose(loss, ref, rtol=1e-5, atol=1e-6), (loss, ref)

    # Default (auto) path on the same tiny shape -> plain-XLA fallback.
    loss_fb = rmse_loss(yhat, y)
    jax.block_until_ready(loss_fb)
    assert jnp.allclose(loss_fb, ref, rtol=1e-5, atol=1e-6), (loss_fb, ref)

    # Ragged shapes: non-multiple-of-8 batch, odd feature dim; two B tiles
    # (exercises partial-B writeback clipping and the >=2-tile clamp).
    B2, D2 = 37, 300
    yhat2 = jax.random.normal(k3, (B2, D2), dtype=jnp.float32)
    y2 = jax.random.normal(k4, (B2, D2), dtype=jnp.float32)
    loss2 = rmse_loss(yhat2, y2, use_pallas=True)
    jax.block_until_ready(loss2)
    ref2 = _reference(yhat2, y2)
    assert jnp.allclose(loss2, ref2, rtol=1e-5, atol=1e-6), (loss2, ref2)

    # bf16 inputs with D > one lane tile and a non-128-aligned tail: exercises
    # the streaming D loop, last-tile-only masking, and bf16 sublane rounding.
    B3, D3 = 48, 2200
    yhat3 = jax.random.normal(k5, (B3, D3), dtype=jnp.bfloat16)
    y3 = jax.random.normal(k6, (B3, D3), dtype=jnp.bfloat16)
    loss3 = rmse_loss(yhat3, y3, use_pallas=True)
    jax.block_until_ready(loss3)
    ref3 = _reference(yhat3, y3)
    assert jnp.allclose(loss3, ref3, rtol=1e-4, atol=1e-5), (loss3, ref3)

    print("KERNEL_OK")
</pallas_src>

<mosaic_0001>
module attributes {stable_mosaic.version = 11 : i64} {
  func.func @kernel(%arg0: i32, %arg1: i32, %arg2: memref<8x128xf32, #tpu.memory_space<vmem>>, %arg3: memref<8x128xf32, #tpu.memory_space<vmem>>, %arg4: memref<8x1xf32, #tpu.memory_space<vmem>>, %arg5: memref<8x1xf32, #tpu.memory_space<vmem>>) attributes {dimension_semantics = [#tpu.dimension_semantics<parallel>, #tpu.dimension_semantics<arbitrary>], iteration_bounds = array<i64: 1, 1>, scalar_prefetch = 0 : i64, scratch_operands = 1 : i64, tpu.core_type = #tpu.core_type<tc>, window_params = [{transform_indices = @transform_0, window_bounds = array<i64: 8, 128>}, {transform_indices = @transform_1, window_bounds = array<i64: 8, 128>}, {transform_indices = @transform_2, window_bounds = array<i64: 8, 1>}]} {
    %c0_i32 = arith.constant 0 : i32
    %0 = arith.cmpi eq, %arg1, %c0_i32 : i32
    %1 = arith.extui %0 : i1 to i32
    %c0_i32_0 = arith.constant 0 : i32
    %2 = arith.cmpi ne, %1, %c0_i32_0 : i32
    scf.if %2 {
      %cst_10 = arith.constant 0.000000e+00 : f32
      %15 = vector.broadcast %cst_10 : f32 to vector<8x1xf32>
      %c0_11 = arith.constant 0 : index
      %c0_12 = arith.constant 0 : index
      %16 = vector.load %arg5[%c0_11, %c0_12] : memref<8x1xf32, #tpu.memory_space<vmem>>, vector<8x1xf32>
      tpu.vector_store %arg5[%c0_11, %c0_12], %15 {strides = array<i32>} : memref<8x1xf32, #tpu.memory_space<vmem>>, vector<8x1xf32>,
    } else {
    }
    %c0 = arith.constant 0 : index
    %c0_1 = arith.constant 0 : index
    %3 = vector.load %arg2[%c0, %c0_1] : memref<8x128xf32, #tpu.memory_space<vmem>>, vector<8x128xf32>
    %c0_2 = arith.constant 0 : index
    %c0_3 = arith.constant 0 : index
    %4 = vector.load %arg3[%c0_2, %c0_3] : memref<8x128xf32, #tpu.memory_space<vmem>>, vector<8x128xf32>
    %5 = arith.subf %3, %4 : vector<8x128xf32>
    %6 = arith.mulf %5, %5 : vector<8x128xf32>
    %c0_4 = arith.constant 0 : index
    %c0_5 = arith.constant 0 : index
    %7 = vector.load %arg5[%c0_4, %c0_5] : memref<8x1xf32, #tpu.memory_space<vmem>>, vector<8x1xf32>
    %cst = arith.constant dense<0.000000e+00> : vector<8xf32>
    %8 = vector.multi_reduction <add>, %6, %cst [1] : vector<8x128xf32> to vector<8xf32>
    %9 = vector.shape_cast %8 : vector<8xf32> to vector<8x1xf32>
    %10 = arith.addf %7, %9 : vector<8x1xf32>
    %c0_6 = arith.constant 0 : index
    %c0_7 = arith.constant 0 : index
    %11 = vector.load %arg5[%c0_6, %c0_7] : memref<8x1xf32, #tpu.memory_space<vmem>>, vector<8x1xf32>
    tpu.vector_store %arg5[%c0_6, %c0_7], %10 {strides = array<i32>} : memref<8x1xf32, #tpu.memory_space<vmem>>, vector<8x1xf32>,
    %c0_i32_8 = arith.constant 0 : i32
    %12 = arith.cmpi eq, %arg1, %c0_i32_8 : i32
    %13 = arith.extui %12 : i1 to i32
    %c0_i32_9 = arith.constant 0 : i32
    %14 = arith.cmpi ne, %13, %c0_i32_9 : i32
    scf.if %14 {
      %c0_10 = arith.constant 0 : index
      %c0_11 = arith.constant 0 : index
      %15 = vector.load %arg5[%c0_10, %c0_11] : memref<8x1xf32, #tpu.memory_space<vmem>>, vector<8x1xf32>
      %cst_12 = arith.constant 7.812500e-03 : f32
      %16 = vector.broadcast %cst_12 : f32 to vector<8x1xf32>
      %17 = arith.mulf %15, %16 : vector<8x1xf32>
      %cst_13 = arith.constant 9.99999993E-9 : f32
      %18 = vector.broadcast %cst_13 : f32 to vector<8x1xf32>
      %19 = arith.addf %17, %18 : vector<8x1xf32>
      %20 = math.sqrt %19 : vector<8x1xf32>
      %c0_14 = arith.constant 0 : index
      %c0_15 = arith.constant 0 : index
      %21 = vector.load %arg4[%c0_14, %c0_15] : memref<8x1xf32, #tpu.memory_space<vmem>>, vector<8x1xf32>
      tpu.vector_store %arg4[%c0_14, %c0_15], %20 {strides = array<i32>} : memref<8x1xf32, #tpu.memory_space<vmem>>, vector<8x1xf32>,
    } else {
    }
    return
  }
  func.func @transform_0(%arg0: i32, %arg1: i32) -> (i32, i32) {
    %c0_i32 = arith.constant 0 : i32
    return %arg0, %arg1 : i32, i32
  }
  func.func @transform_1(%arg0: i32, %arg1: i32) -> (i32, i32) {
    %c0_i32 = arith.constant 0 : i32
    return %arg0, %arg1 : i32, i32
  }
  func.func @transform_2(%arg0: i32, %arg1: i32) -> (i32, i32) {
    %c0_i32 = arith.constant 0 : i32
    %c0_i32_0 = arith.constant 0 : i32
    return %arg0, %c0_i32 : i32, i32
  }
}

</mosaic_0001>

<llo_original>
// kernel: tpu_custom_call.1
$region0: #{tpu_custom_call.1}
  #allocation0 [shape = 'u32[]', space=smem, size = 0x4, offset = 0x4, fixed_abs, tag = 'smem constant byte address 0x4 - core index']
  #allocation1 [shape = 'u32[144,128]{1,0:T(1,128)}', space=vmem, size = 0x12000, scoped, tag = 'internal scratch']
  #allocation2 [shape = 'f32[8,1]{1,0:T(8,128)}', space=vmem, size = 0x1000, scoped, tag = 'scratch operand']
  %s0 = inlined_call_operand.hbm [shape: f32[8,128], index: 0, kind: input, shape index: {}]
  %s1 = inlined_call_operand.hbm [shape: f32[8,128], index: 1, kind: input, shape index: {}]
  %s2 = inlined_call_operand.vmem [shape: f32[8,1], index: 2, kind: output, shape index: {}]
  %s3 = sld [smem:[#allocation0]]
  $region34: #{tpu_custom_call.1} parent=0
    _
  %s5 = ssub.s32 1, %s3
  %s6 = scalar_select 0, %s5, %s3
  $region1: #{tpu_custom_call.1} parent=0
    #allocation3 [shape = 'u8[4096]{0}', space=vmem, size = 0x1000, scoped, tag = 'input window, operand 0, single buffered']
    #allocation4 [shape = 's32[1]{0}', space=sflag, size = 0x4, scoped, tag = 'scoped memory for tpu_custom_call.1']
    #allocation5 [shape = 'u8[4096]{0}', space=vmem, size = 0x1000, scoped, tag = 'input window, operand 1, single buffered']
    #allocation6 [shape = 's32[1]{0}', space=sflag, size = 0x4, scoped, tag = 'scoped memory for tpu_custom_call.1']
    %7 = vsyncpa [#allocation4], 0
    %8 = vsyncpa [#allocation6], 0
    // Predicated region
    $region2: #{tpu_custom_call.1} parent=1 // pred_check
      _
    $region3: #{tpu_custom_call.1} parent=1 // pred_check_branch
      %10 = sbr.rel (0) target = $region5
    $region4: #{tpu_custom_call.1} parent=1 // pred_region
      %s12 = ssub.s32 128, 128
      %13 = vsyncadd [#allocation4], %s12
      %s15 = sshll.u32 [#allocation3], 4
      %s16 = int_to_ptr.vmem [resolvable:$true] %s15
      %18 = dma.hbm_to_vmem [thread:$0]  %s0, 128, %s16, [#allocation4]
    $region5: #{tpu_custom_call.1} parent=1 // pred_fallthru
      _
    // Predicated region
    $region6: #{tpu_custom_call.1} parent=1 // pred_check
      _
    $region7: #{tpu_custom_call.1} parent=1 // pred_check_branch
      %20 = sbr.rel (0) target = $region9
    $region8: #{tpu_custom_call.1} parent=1 // pred_region
      %s22 = ssub.s32 128, 128
      %23 = vsyncadd [#allocation6], %s22
      %s25 = sshll.u32 [#allocation5], 4
      %s26 = int_to_ptr.vmem [resolvable:$true] %s25
      %28 = dma.hbm_to_vmem [thread:$0]  %s1, 128, %s26, [#allocation6]
    $region9: #{tpu_custom_call.1} parent=1 // pred_fallthru
      _
    // Predicated region
    $region10: #{tpu_custom_call.1} parent=1 // pred_check
      _
    $region11: #{tpu_custom_call.1} parent=1 // pred_check_branch
      %30 = sbr.rel (0) target = $region13
    $region12: #{tpu_custom_call.1} parent=1 // pred_region
      %31 = dma.done [#allocation4], 128
    $region13: #{tpu_custom_call.1} parent=1 // pred_fallthru
      _
    // Predicated region
    $region14: #{tpu_custom_call.1} parent=1 // pred_check
      _
    $region15: #{tpu_custom_call.1} parent=1 // pred_check_branch
      %33 = sbr.rel (0) target = $region17
    $region16: #{tpu_custom_call.1} parent=1 // pred_region
      %34 = dma.done [#allocation6], 128
    $region17: #{tpu_custom_call.1} parent=1 // pred_fallthru
      _
    %p35 = scmp.eq.s32.totalorder 0, 0
    // Predicated region
    $region18: #{tpu_custom_call.1} parent=1 // pred_check
      %p36 = pneg %p35
    $region19: #{tpu_custom_call.1} parent=1 // pred_check_branch
      %38 = sbr.rel (%p36) target = $region21
    $region20: #{tpu_custom_call.1} parent=1 // pred_region
      %vm39 = vcmask 7168
      %40 = vst.msk [vmem:[#allocation2] sm:$0xff] %vm39, 0.0
    $region21: #{tpu_custom_call.1} parent=1 // pred_fallthru
      _
    %v41 = vld [vmem:[#allocation3] sm:$0xff]
    %v42 = vld [vmem:[#allocation5] sm:$0xff]
    %v43 = vsub.f32 %v41, %v42
    %v44 = vmul.f32 %v43, %v43
    %v45 = vld [vmem:[#allocation2] sm:$0xff]
    %46 = vadd.xlane.f32.xlu0 %v44
    %v47 = vpop.xlane.xlu0 %46
    %v48 = vadd.f32 %v45, %v47
    %vm49 = vcmask 7168
    %50 = vst.msk [vmem:[#allocation2] sm:$0xff] %vm49, %v48
    // Predicated region
    $region22: #{tpu_custom_call.1} parent=1 // pred_check
      %p51 = pneg %p35
    $region23: #{tpu_custom_call.1} parent=1 // pred_check_branch
      %53 = sbr.rel (%p51) target = $region25
    $region24: #{tpu_custom_call.1} parent=1 // pred_region
      %v54 = vld [vmem:[#allocation2] sm:$0xff]
      %v55 = vmul.f32 %v54, 0.0078125
      %v56 = vadd.f32 %v55, 1e-08
      %v57 = vrsqrt.pop %v56
      %v58 = vmul.f32 %v56, %v57
      %vm59 = vcmp.eq.f32.partialorder %v56, inf
      %v60 = vsel %vm59, %v56, %v58
      %vm61 = vcmp.eq.f32.partialorder %v56, 0.0
      %v62 = vand.u32 %v56, 2147483648
      %v63 = vsel %vm61, %v62, %v60
      %64 = vst.msk [vmem:[%s2] sm:$0xff] %vm49, %v63
    $region25: #{tpu_custom_call.1} parent=1 // pred_fallthru
      _
    // Predicated region
    $region26: #{tpu_custom_call.1} parent=1 // pred_check
      _
    $region27: #{tpu_custom_call.1} parent=1 // pred_check_branch
      %66 = sbr.rel (0) target = $region29
    $region28: #{tpu_custom_call.1} parent=1 // pred_region
      _
    $region29: #{tpu_custom_call.1} parent=1 // pred_fallthru
      _
    // Predicated region
    $region30: #{tpu_custom_call.1} parent=1 // pred_check
      _
    $region31: #{tpu_custom_call.1} parent=1 // pred_check_branch
      %68 = sbr.rel (0) target = $region33
    $region32: #{tpu_custom_call.1} parent=1 // pred_region
      _
    $region33: #{tpu_custom_call.1} parent=1 // pred_fallthru
      _
    %69 = vsyncpa [#allocation4], 1
    %70 = vsyncpa [#allocation6], 1

</llo_original>
